<compile_context>
chip_gen: v6e
topology: v6e:2x2x1
jax: 0.10.0
libtpu: 0.0.40
codegen_flags: <defaults>
</compile_context>

<pallas_src>
import functools

import jax
import jax.numpy as jnp
from jax.experimental import pallas as pl
from jax.experimental.pallas import tpu as pltpu


# ----------------------------------------------------------------------------
# Kernel
# ----------------------------------------------------------------------------
def simple_mlp_kernel(x_ref, w1_ref, b1_ref, w2_ref, b2_ref, out_ref):
    # Cast the streamed x tile to the matmul dtype *inside* the kernel (VPU
    # cast is free here; doing it in the wrapper would add a full HBM pass).
    x = x_ref[...].astype(w1_ref.dtype)
    # h = x @ W1 + b1           (tb, H), f32 accumulation on the MXU.
    h = jnp.dot(x, w1_ref[...], preferred_element_type=jnp.float32) + b1_ref[...]
    # ReLU in f32 on the VPU, then cast so the second matmul stays on the
    # bf16 MXU path when weights are bf16 (no-op for f32 weights).
    r = jnp.maximum(h, 0.0).astype(w2_ref.dtype)
    # out = relu(h) @ W2 + b2   (tb, D_out_padded), f32 accumulation.
    out = jnp.dot(r, w2_ref[...], preferred_element_type=jnp.float32) + b2_ref[...]
    out_ref[...] = out.astype(out_ref.dtype)


# ----------------------------------------------------------------------------
# Parameter prep (one-time, outside the hot path)
# ----------------------------------------------------------------------------
def _round_up(x, m):
    return ((x + m - 1) // m) * m


def prepare_params(w1, b1, w2, b2, *, matmul_dtype=jnp.bfloat16, lane=128):
    """PyTorch nn.Linear stores weights as (out, in); pre-transpose to (in, out)
    so the kernel does plain `x @ W`. Biases become (1, D) f32 rows. W2/b2 are
    zero-padded along D_out to the next multiple of 128 so output stores are
    lane-dense (unmasked vst); the wrapper slices the padding off.

    bf16 weights are the default on all generations (v5e/v6e/v7x MXUs are
    bf16-native); pass matmul_dtype=jnp.float32 for a bit-exact path.
    """
    d_out = w2.shape[0]
    d_out_p = _round_up(d_out, lane)

    w1t = w1.T.astype(matmul_dtype)                    # (D_in, H)
    b1r = b1.reshape(1, -1).astype(jnp.float32)        # (1, H)
    w2t = w2.T.astype(matmul_dtype)                    # (H, D_out)
    b2r = b2.reshape(1, -1).astype(jnp.float32)        # (1, D_out)
    if d_out_p != d_out:
        w2t = jnp.pad(w2t, ((0, 0), (0, d_out_p - d_out)))
        b2r = jnp.pad(b2r, ((0, 0), (0, d_out_p - d_out)))
    return w1t, b1r, w2t, b2r, d_out


def _choose_tile_b(B, tile_b, *, align=16, min_steps=2):
    """Pick the batch tile: sublane-aligned, capped so the grid has at least
    `min_steps` steps whenever B allows it (pipelining + v7x megacore)."""
    if B <= align:
        return B                          # single full-array block is legal
    cap = _round_up(-(-B // min_steps), align)   # ceil(B/min_steps) rounded up
    return max(align, min(tile_b, cap))


# ----------------------------------------------------------------------------
# Forward wrapper
# ----------------------------------------------------------------------------
@functools.partial(jax.jit, static_argnames=("tile_b", "out_dtype", "d_out"))
def simple_mlp_forward(x, w1t, b1r, w2t, b2r, *, d_out, tile_b=1024,
                       out_dtype=jnp.float32):
    """x: (B, D_in); w1t: (D_in, H); b1r: (1, H); w2t: (H, D_out_p);
    b2r: (1, D_out_p). Returns (B, d_out) in out_dtype."""
    B, D_in = x.shape
    H = w1t.shape[1]
    D_out_p = w2t.shape[1]

    tb = _choose_tile_b(B, tile_b)
    grid = (pl.cdiv(B, tb),)

    # Explicit VMEM budget: 2x double-buffered x tile + 2x out tile + resident
    # weights/biases, with headroom; clipped to stay well inside v7x's 64 MiB.
    x_bytes = 2 * tb * D_in * x.dtype.itemsize
    o_bytes = 2 * tb * D_out_p * jnp.dtype(out_dtype).itemsize
    w_bytes = (w1t.size * w1t.dtype.itemsize + w2t.size * w2t.dtype.itemsize
               + b1r.size * 4 + b2r.size * 4)
    vmem_limit = int(min(max(2 * (x_bytes + o_bytes + w_bytes) + (4 << 20),
                             16 << 20), 48 << 20))

    resident = lambda shape: pl.BlockSpec(shape, lambda i: (0, 0))

    out = pl.pallas_call(
        simple_mlp_kernel,
        out_shape=jax.ShapeDtypeStruct((B, D_out_p), out_dtype),
        grid=grid,
        in_specs=[
            pl.BlockSpec((tb, D_in), lambda i: (i, 0)),   # x: streamed per tile
            resident((D_in, H)),                          # W1^T: resident
            resident((1, H)),                             # b1
            resident((H, D_out_p)),                       # W2^T: resident
            resident((1, D_out_p)),                       # b2
        ],
        out_specs=pl.BlockSpec((tb, D_out_p), lambda i: (i, 0)),
        compiler_params=pltpu.CompilerParams(
            dimension_semantics=("parallel",),            # 2 TCs on v7x
            vmem_limit_bytes=vmem_limit),
    )(x, w1t, b1r, w2t, b2r)

    return out[:, :d_out] if d_out != D_out_p else out


def simple_mlp_reference(x, w1, b1, w2, b2):
    h = x @ w1.T + b1
    return jnp.maximum(h, 0.0) @ w2.T + b2


# ----------------------------------------------------------------------------
# Demo / correctness check
# ----------------------------------------------------------------------------
if __name__ == "__main__":
    # hidden=64 is fixed by SimpleMLP; D_OUT=10 deliberately non-lane-aligned
    # to exercise the pad-to-128 + slice path; B=256 with the default tiling
    # gives a 2-step grid (pipelined, megacore-shardable).
    B, D_IN, HIDDEN, D_OUT = 256, 16, 64, 10

    key = jax.random.PRNGKey(0)
    kx, k1, kb1, k2, kb2 = jax.random.split(key, 5)

    x = jax.random.normal(kx, (B, D_IN), dtype=jnp.float32)
    bound1 = 1.0 / (D_IN ** 0.5)
    w1 = jax.random.uniform(k1, (HIDDEN, D_IN), jnp.float32, -bound1, bound1)
    b1 = jax.random.uniform(kb1, (HIDDEN,), jnp.float32, -bound1, bound1)
    bound2 = 1.0 / (HIDDEN ** 0.5)
    w2 = jax.random.uniform(k2, (D_OUT, HIDDEN), jnp.float32, -bound2, bound2)
    b2 = jax.random.uniform(kb2, (D_OUT,), jnp.float32, -bound2, bound2)

    ref = simple_mlp_reference(x, w1, b1, w2, b2)

    # --- f32 weights, f32 output: tight check against the reference --------
    w1t, b1r, w2t, b2r, d_out = prepare_params(
        w1, b1, w2, b2, matmul_dtype=jnp.float32)
    out_f32 = jax.block_until_ready(
        simple_mlp_forward(x, w1t, b1r, w2t, b2r, d_out=d_out,
                           out_dtype=jnp.float32))
    assert out_f32.shape == (B, D_OUT)
    assert jnp.allclose(out_f32, ref, atol=1e-4, rtol=1e-4)

    # --- bf16 weights (default path), bf16 output stores: looser tolerance --
    w1t, b1r, w2t, b2r, d_out = prepare_params(
        w1, b1, w2, b2, matmul_dtype=jnp.bfloat16)
    out_bf16 = jax.block_until_ready(
        simple_mlp_forward(x, w1t, b1r, w2t, b2r, d_out=d_out,
                           out_dtype=jnp.bfloat16))
    assert out_bf16.shape == (B, D_OUT)
    assert jnp.allclose(out_bf16.astype(jnp.float32), ref, atol=5e-2, rtol=5e-2)

    print("KERNEL_OK")
</pallas_src>

<mosaic_0001>
module attributes {stable_mosaic.version = 11 : i64} {
  func.func @simple_mlp_kernel(%arg0: i32, %arg1: memref<128x16xf32, #tpu.memory_space<vmem>>, %arg2: memref<16x64xf32, #tpu.memory_space<vmem>>, %arg3: memref<1x64xf32, #tpu.memory_space<vmem>>, %arg4: memref<64x128xf32, #tpu.memory_space<vmem>>, %arg5: memref<1x128xf32, #tpu.memory_space<vmem>>, %arg6: memref<128x128xf32, #tpu.memory_space<vmem>>) attributes {dimension_semantics = [#tpu.dimension_semantics<parallel>], iteration_bounds = array<i64: 2>, scalar_prefetch = 0 : i64, scratch_operands = 0 : i64, tpu.core_type = #tpu.core_type<tc>, window_params = [{transform_indices = @transform_0, window_bounds = array<i64: 128, 16>}, {pipeline_mode = #tpu.pipeline_mode<synchronous>, transform_indices = @transform_1, window_bounds = array<i64: 16, 64>}, {pipeline_mode = #tpu.pipeline_mode<synchronous>, transform_indices = @transform_2, window_bounds = array<i64: 1, 64>}, {pipeline_mode = #tpu.pipeline_mode<synchronous>, transform_indices = @transform_3, window_bounds = array<i64: 64, 128>}, {pipeline_mode = #tpu.pipeline_mode<synchronous>, transform_indices = @transform_4, window_bounds = array<i64: 1, 128>}, {transform_indices = @transform_5, window_bounds = array<i64: 128, 128>}]} {
    %c0 = arith.constant 0 : index
    %c0_0 = arith.constant 0 : index
    %0 = vector.load %arg1[%c0, %c0_0] : memref<128x16xf32, #tpu.memory_space<vmem>>, vector<128x16xf32>
    %c0_1 = arith.constant 0 : index
    %c0_2 = arith.constant 0 : index
    %1 = vector.load %arg2[%c0_1, %c0_2] : memref<16x64xf32, #tpu.memory_space<vmem>>, vector<16x64xf32>
    %cst = arith.constant dense<0.000000e+00> : vector<128x64xf32>
    %2 = tpu.matmul %0, %1, %cst {dimension_numbers = #tpu.dot_dimension_numbers<[1], [0], [0], [1], [0, 0, 1, 1], [], []>} : vector<128x16xf32>, vector<16x64xf32>, vector<128x64xf32> -> vector<128x64xf32>
    %c0_3 = arith.constant 0 : index
    %c0_4 = arith.constant 0 : index
    %3 = vector.load %arg3[%c0_3, %c0_4] : memref<1x64xf32, #tpu.memory_space<vmem>>, vector<1x64xf32>
    %4 = vector.broadcast %3 : vector<1x64xf32> to vector<128x64xf32>
    %5 = arith.addf %2, %4 : vector<128x64xf32>
    %cst_5 = arith.constant 0.000000e+00 : f32
    %6 = vector.broadcast %cst_5 : f32 to vector<128x64xf32>
    %7 = arith.maximumf %5, %6 : vector<128x64xf32>
    %c0_6 = arith.constant 0 : index
    %c0_7 = arith.constant 0 : index
    %8 = vector.load %arg4[%c0_6, %c0_7] : memref<64x128xf32, #tpu.memory_space<vmem>>, vector<64x128xf32>
    %cst_8 = arith.constant dense<0.000000e+00> : vector<128x128xf32>
    %9 = tpu.matmul %7, %8, %cst_8 {dimension_numbers = #tpu.dot_dimension_numbers<[1], [0], [0], [1], [0, 0, 1, 1], [], []>} : vector<128x64xf32>, vector<64x128xf32>, vector<128x128xf32> -> vector<128x128xf32>
    %c0_9 = arith.constant 0 : index
    %c0_10 = arith.constant 0 : index
    %10 = vector.load %arg5[%c0_9, %c0_10] : memref<1x128xf32, #tpu.memory_space<vmem>>, vector<1x128xf32>
    %11 = vector.broadcast %10 : vector<1x128xf32> to vector<128x128xf32>
    %12 = arith.addf %9, %11 : vector<128x128xf32>
    %c0_11 = arith.constant 0 : index
    %c0_12 = arith.constant 0 : index
    %13 = vector.load %arg6[%c0_11, %c0_12] : memref<128x128xf32, #tpu.memory_space<vmem>>, vector<128x128xf32>
    tpu.vector_store %arg6[%c0_11, %c0_12], %12 {strides = array<i32>} : memref<128x128xf32, #tpu.memory_space<vmem>>, vector<128x128xf32>,
    return
  }
  func.func @transform_0(%arg0: i32) -> (i32, i32) {
    %c0_i32 = arith.constant 0 : i32
    %c0_i32_0 = arith.constant 0 : i32
    return %arg0, %c0_i32 : i32, i32
  }
  func.func @transform_1(%arg0: i32) -> (i32, i32) {
    %c0_i32 = arith.constant 0 : i32
    %c0_i32_0 = arith.constant 0 : i32
    %c0_i32_1 = arith.constant 0 : i32
    return %c0_i32, %c0_i32_0 : i32, i32
  }
  func.func @transform_2(%arg0: i32) -> (i32, i32) {
    %c0_i32 = arith.constant 0 : i32
    %c0_i32_0 = arith.constant 0 : i32
    %c0_i32_1 = arith.constant 0 : i32
    return %c0_i32, %c0_i32_0 : i32, i32
  }
  func.func @transform_3(%arg0: i32) -> (i32, i32) {
    %c0_i32 = arith.constant 0 : i32
    %c0_i32_0 = arith.constant 0 : i32
    %c0_i32_1 = arith.constant 0 : i32
    return %c0_i32, %c0_i32_0 : i32, i32
  }
  func.func @transform_4(%arg0: i32) -> (i32, i32) {
    %c0_i32 = arith.constant 0 : i32
    %c0_i32_0 = arith.constant 0 : i32
    %c0_i32_1 = arith.constant 0 : i32
    return %c0_i32, %c0_i32_0 : i32, i32
  }
  func.func @transform_5(%arg0: i32) -> (i32, i32) {
    %c0_i32 = arith.constant 0 : i32
    %c0_i32_0 = arith.constant 0 : i32
    return %arg0, %c0_i32 : i32, i32
  }
}

</mosaic_0001>

<llo_original>
// kernel: simple_mlp_forward.1
$region0: #{simple_mlp_forward.1}
  #allocation0 [shape = 'u32[]', space=smem, size = 0x4, offset = 0x4, fixed_abs, tag = 'smem constant byte address 0x4 - core index']
  #allocation1 [shape = 'u32[144,128]{1,0:T(1,128)}', space=vmem, size = 0x12000, scoped, tag = 'internal scratch']
  %s0 = inlined_call_operand.vmem [shape: f32[256,16], index: 0, kind: input, shape index: {}]
  %s1 = inlined_call_operand.vmem [shape: f32[16,64], index: 1, kind: input, shape index: {}]
  %s2 = inlined_call_operand.vmem [shape: f32[1,64], index: 2, kind: input, shape index: {}]
  %s3 = inlined_call_operand.vmem [shape: f32[64,128], index: 3, kind: input, shape index: {}]
  %s4 = inlined_call_operand.vmem [shape: f32[1,128], index: 4, kind: input, shape index: {}]
  %s5 = inlined_call_operand.vmem [shape: f32[256,128], index: 5, kind: output, shape index: {}]
  %s6 = sld [smem:[#allocation0]]
  $region53: #{simple_mlp_forward.1} parent=0
    _
  %s8 = ssub.s32 1, %s6
  %s9 = scalar_select 0, %s8, %s6
  loop: start=0, step=1, limit=4
  $region2: #{simple_mlp_forward.1} parent=0 // loop_pre_header
    _
  $region3: #{simple_mlp_forward.1} parent=0 // loop_header
    %s11 = sphi 0, %s15
    %p12 = scmp.ge.s32.totalorder %s11, 4
    %s21 = sphi 0, %s23
    %s24 = sphi 0, %s21
    %s25 = sphi 0, %s24
    %s41 = sphi 0, %s25
    %s45 = sphi 0, %s45
    %s47 = sphi 0, %s45
    %s48 = sphi 0, %s47
    %s62 = sphi 0, %s48
    %s66 = sphi 0, %s66
    %s68 = sphi 0, %s66
    %s69 = sphi 0, %s68
    %s83 = sphi 0, %s69
    %s87 = sphi 0, %s87
    %s89 = sphi 0, %s87
    %s90 = sphi 0, %s89
    %s104 = sphi 0, %s90
    %s108 = sphi 0, %s108
    %s110 = sphi 0, %s108
    %s111 = sphi 0, %s110
    %s125 = sphi 0, %s111
    %s131 = sphi 0, %s133
    %s134 = sphi 0, %s131
    %s135 = sphi 0, %s134
    %s151 = sphi 0, %s135
  $region4: #{simple_mlp_forward.1} parent=0 // loop_header_branch
    %14 = sbr.rel (%p12) target = $region8
  $region5: #{simple_mlp_forward.1} parent=0 // loop_body
    %s16 = ssub.s32 %s11, 1
    %s17 = ssub.s32 %s11, 2
    %s18 = sadd.s32 %s11, 1
    %s19 = ssub.s32 %s11, %s18
    %p20 = scmp.eq.s32.totalorder %s19, 0
    %s22 = sadd.s32 %s21, 1
    %s23 = scalar_select %p20, %s21, %s22
    %p26 = pneg %p20
    %p27 = scmp.eq.s32.totalorder %s11, 1
    %p28 = por %p26, %p27
    %p29 = scmp.ne.s32.totalorder %s21, %s24
    %p30 = scmp.eq.s32.totalorder %s11, 0
    %p31 = por %p29, %p30
    %p32 = scmp.ne.s32.totalorder %s21, %s24
    %p33 = scmp.eq.s32.totalorder %s16, 1
    %p34 = por %p32, %p33
    %p35 = scmp.ne.s32.totalorder %s24, %s25
    %p36 = scmp.eq.s32.totalorder %s16, 0
    %p37 = por %p35, %p36
    %p38 = scmp.ne.s32.totalorder %s24, %s25
    %p39 = scmp.eq.s32.totalorder %s17, 1
    %p40 = por %p38, %p39
    %p42 = scmp.ne.s32.totalorder %s25, %s41
    %p43 = scmp.eq.s32.totalorder %s17, 0
    %p44 = por %p42, %p43
    %s46 = sadd.s32 %s45, 1
    %p49 = scmp.eq.s32.totalorder %s11, 1
    %p50 = scmp.ne.s32.totalorder %s45, %s47
    %p51 = scmp.eq.s32.totalorder %s11, 0
    %p52 = por %p50, %p51
    %p53 = scmp.ne.s32.totalorder %s45, %s47
    %p54 = scmp.eq.s32.totalorder %s16, 1
    %p55 = por %p53, %p54
    %p56 = scmp.ne.s32.totalorder %s47, %s48
    %p57 = scmp.eq.s32.totalorder %s16, 0
    %p58 = por %p56, %p57
    %p59 = scmp.ne.s32.totalorder %s47, %s48
    %p60 = scmp.eq.s32.totalorder %s17, 1
    %p61 = por %p59, %p60
    %p63 = scmp.ne.s32.totalorder %s48, %s62
    %p64 = scmp.eq.s32.totalorder %s17, 0
    %p65 = por %p63, %p64
    %s67 = sadd.s32 %s66, 1
    %p70 = scmp.eq.s32.totalorder %s11, 1
    %p71 = scmp.ne.s32.totalorder %s66, %s68
    %p72 = scmp.eq.s32.totalorder %s11, 0
    %p73 = por %p71, %p72
    %p74 = scmp.ne.s32.totalorder %s66, %s68
    %p75 = scmp.eq.s32.totalorder %s16, 1
    %p76 = por %p74, %p75
    %p77 = scmp.ne.s32.totalorder %s68, %s69
    %p78 = scmp.eq.s32.totalorder %s16, 0
    %p79 = por %p77, %p78
    %p80 = scmp.ne.s32.totalorder %s68, %s69
    %p81 = scmp.eq.s32.totalorder %s17, 1
    %p82 = por %p80, %p81
    %p84 = scmp.ne.s32.totalorder %s69, %s83
    %p85 = scmp.eq.s32.totalorder %s17, 0
    %p86 = por %p84, %p85
    %s88 = sadd.s32 %s87, 1
    %p91 = scmp.eq.s32.totalorder %s11, 1
    %p92 = scmp.ne.s32.totalorder %s87, %s89
    %p93 = scmp.eq.s32.totalorder %s11, 0
    %p94 = por %p92, %p93
    %p95 = scmp.ne.s32.totalorder %s87, %s89
    %p96 = scmp.eq.s32.totalorder %s16, 1
    %p97 = por %p95, %p96
    %p98 = scmp.ne.s32.totalorder %s89, %s90
    %p99 = scmp.eq.s32.totalorder %s16, 0
    %p100 = por %p98, %p99
    %p101 = scmp.ne.s32.totalorder %s89, %s90
    %p102 = scmp.eq.s32.totalorder %s17, 1
    %p103 = por %p101, %p102
    %p105 = scmp.ne.s32.totalorder %s90, %s104
    %p106 = scmp.eq.s32.totalorder %s17, 0
    %p107 = por %p105, %p106
    %s109 = sadd.s32 %s108, 1
    %p112 = scmp.eq.s32.totalorder %s11, 1
    %p113 = scmp.ne.s32.totalorder %s108, %s110
    %p114 = scmp.eq.s32.totalorder %s11, 0
    %p115 = por %p113, %p114
    %p116 = scmp.ne.s32.totalorder %s108, %s110
    %p117 = scmp.eq.s32.totalorder %s16, 1
    %p118 = por %p116, %p117
    %p119 = scmp.ne.s32.totalorder %s110, %s111
    %p120 = scmp.eq.s32.totalorder %s16, 0
    %p121 = por %p119, %p120
    %p122 = scmp.ne.s32.totalorder %s110, %s111
    %p123 = scmp.eq.s32.totalorder %s17, 1
    %p124 = por %p122, %p123
    %p126 = scmp.ne.s32.totalorder %s111, %s125
    %p127 = scmp.eq.s32.totalorder %s17, 0
    %p128 = por %p126, %p127
    %s129 = ssub.s32 %s11, %s18
    %p130 = scmp.eq.s32.totalorder %s129, 0
    %s132 = sadd.s32 %s131, 1
    %s133 = scalar_select %p130, %s131, %s132
    %p136 = pneg %p130
    %p137 = scmp.eq.s32.totalorder %s11, 1
    %p138 = por %p136, %p137
    %p139 = scmp.ne.s32.totalorder %s131, %s134
    %p140 = scmp.eq.s32.totalorder %s11, 0
    %p141 = por %p139, %p140
    %p142 = scmp.ne.s32.totalorder %s131, %s134
    %p143 = scmp.eq.s32.totalorder %s16, 1
    %p144 = por %p142, %p143
    %p145 = scmp.ne.s32.totalorder %s134, %s135
    %p146 = scmp.eq.s32.totalorder %s16, 0
    %p147 = por %p145, %p146
    %p148 = scmp.ne.s32.totalorder %s134, %s135
    %p149 = scmp.eq.s32.totalorder %s17, 1
    %p150 = por %p148, %p149
    %p152 = scmp.ne.s32.totalorder %s135, %s151
    %p153 = scmp.eq.s32.totalorder %s17, 0
    %p154 = por %p152, %p153
    %p155 = scmp.le.s32.totalorder 1, %s11
    %p156 = scmp.lt.s32.totalorder %s11, 3
    %p157 = pnand %p155, %p156
    %p158 = pneg %p157
    // Predicated region
    $region9: #{simple_mlp_forward.1} parent=5 // pred_check
      _
    $region10: #{simple_mlp_forward.1} parent=5 // pred_check_branch
      %160 = sbr.rel (%p157) target = $region12
    $region11: #{simple_mlp_forward.1} parent=5 // pred_region
      %s161 = ssub.s32 %s11, 1
      // Predicated region
      $region13: #{simple_mlp_forward.1} parent=11 // pred_check
        %p162 = pneg %p58
      $region14: #{simple_mlp_forward.1} parent=11 // pred_check_branch
        %164 = sbr.rel (%p162) target = $region16
      $region15: #{simple_mlp_forward.1} parent=11 // pred_region
        _
      $region16: #{simple_mlp_forward.1} parent=11 // pred_fallthru
        _
      // Predicated region
      $region17: #{simple_mlp_forward.1} parent=11 // pred_check
        %p165 = pneg %p79
      $region18: #{simple_mlp_forward.1} parent=11 // pred_check_branch
        %167 = sbr.rel (%p165) target = $region20
      $region19: #{simple_mlp_forward.1} parent=11 // pred_region
        _
      $region20: #{simple_mlp_forward.1} parent=11 // pred_fallthru
        _
      // Predicated region
      $region21: #{simple_mlp_forward.1} parent=11 // pred_check
        %p168 = pneg %p100
      $region22: #{simple_mlp_forward.1} parent=11 // pred_check_branch
        %170 = sbr.rel (%p168) target = $region24
      $region23: #{simple_mlp_forward.1} parent=11 // pred_region
        _
      $region24: #{simple_mlp_forward.1} parent=11 // pred_fallthru
        _
      // Predicated region
      $region25: #{simple_mlp_forward.1} parent=11 // pred_check
        %p171 = pneg %p121
      $region26: #{simple_mlp_forward.1} parent=11 // pred_check_branch
        %173 = sbr.rel (%p171) target = $region28
      $region27: #{simple_mlp_forward.1} parent=11 // pred_region
        _
      $region28: #{simple_mlp_forward.1} parent=11 // pred_fallthru
        _
    $region12: #{simple_mlp_forward.1} parent=5 // pred_fallthru
      _
    %p174 = scmp.lt.s32.totalorder %s11, 2
    // Predicated region
    $region29: #{simple_mlp_forward.1} parent=5 // pred_check
      %p175 = pneg %p174
    $region30: #{simple_mlp_forward.1} parent=5 // pred_check_branch
      %177 = sbr.rel (%p175) target = $region32
    $region31: #{simple_mlp_forward.1} parent=5 // pred_region
      // Predicated region
      $region33: #{simple_mlp_forward.1} parent=31 // pred_check
        %p178 = pneg %p31
      $region34: #{simple_mlp_forward.1} parent=31 // pred_check_branch
        %180 = sbr.rel (%p178) target = $region36
      $region35: #{simple_mlp_forward.1} parent=31 // pred_region
        %s181 = smul.u32 16, %s11
        %p182 = scmp.lt.s32.totalorder %s181, 31
        %s183 = scalar_select %p182, %s181, 31
        %s184 = smul.addr %s183, 8
        %s185 = scalar_lea.vmem %s0, %s184
        %s186 = smul.u32 16, %s11
      $region36: #{simple_mlp_forward.1} parent=31 // pred_fallthru
        _
    $region32: #{simple_mlp_forward.1} parent=5 // pred_fallthru
      _
    %p187 = scmp.le.s32.totalorder 1, %s11
    %p188 = scmp.lt.s32.totalorder %s11, 3
    %p189 = pnand %p187, %p188
    %p190 = pneg %p189
    // Predicated region
    $region37: #{simple_mlp_forward.1} parent=5 // pred_check
      _
    $region38: #{simple_mlp_forward.1} parent=5 // pred_check_branch
      %192 = sbr.rel (%p189) target = $region40
    $region39: #{simple_mlp_forward.1} parent=5 // pred_region
      %s193 = ssub.s32 %s11, 1
      %s194 = smul.u32 16, %s16
      %p195 = scmp.lt.s32.totalorder %s194, 31
      %s196 = scalar_select %p195, %s194, 31
      %s197 = smul.addr %s196, 8
      %s198 = scalar_lea.vmem %s0, %s197
      %p199 = pneg %p37
      %p200 = pneg %p34
      %p201 = pneg %p58
      %p202 = pneg %p55
      %p203 = pneg %p79
      %p204 = pneg %p76
      %p205 = pneg %p100
      %p206 = pneg %p97
      %p207 = pneg %p121
      %p208 = pneg %p118
      %p209 = pneg %p147
      %p210 = pneg %p144
      %s211 = smul.u32 16, %s16
      %p212 = scmp.lt.s32.totalorder %s211, 31
      %s213 = scalar_select %p212, %s211, 31
      %s214 = smul.addr %s213, 8
      %s215 = scalar_lea.vmem %s5, %s214
      %s216 = smul.u32 16, %s16
      %p217 = scmp.lt.s32.totalorder %s216, 31
      %s218 = scalar_select %p217, %s216, 31
      %s219 = smul.addr %s218, 8
      %s220 = scalar_lea.vmem %s0, %s219
      %s221 = smul.u32 16, %s16
      %s222 = smul.u32 16, %s16
      %p223 = scmp.lt.s32.totalorder %s222, 31
      %s224 = scalar_select %p223, %s222, 31
      %s225 = smul.addr %s224, 8
      %s226 = scalar_lea.vmem %s5, %s225
      %s227 = smul.u32 16, %s16
      %v228 = vld [vmem:[%s220] sm:$0xff]
      %v229 = vld [vmem:[%s220 + $0x8] sm:$0xff]
      %v230 = vld [vmem:[%s220 + $0x10] sm:$0xff]
      %v231 = vld [vmem:[%s220 + $0x18] sm:$0xff]
      %v232 = vld [vmem:[%s220 + $0x20] sm:$0xff]
      %v233 = vld [vmem:[%s220 + $0x28] sm:$0xff]
      %v234 = vld [vmem:[%s220 + $0x30] sm:$0xff]
      %v235 = vld [vmem:[%s220 + $0x38] sm:$0xff]
      %v236 = vld [vmem:[%s220 + $0x40] sm:$0xff]
      %v237 = vld [vmem:[%s220 + $0x48] sm:$0xff]
      %v238 = vld [vmem:[%s220 + $0x50] sm:$0xff]
      %v239 = vld [vmem:[%s220 + $0x58] sm:$0xff]
      %v240 = vld [vmem:[%s220 + $0x60] sm:$0xff]
      %v241 = vld [vmem:[%s220 + $0x68] sm:$0xff]
      %v242 = vld [vmem:[%s220 + $0x70] sm:$0xff]
      %v243 = vld [vmem:[%s220 + $0x78] sm:$0xff]
      %v244 = vld [vmem:[%s1] sm:$0xff]
      %v245 = vld [vmem:[%s1 + $0x8] sm:$0xff]
      %v246 = vld [vmem:[%s2] sm:$0x1]
      %v248 = vlaneseq
      %v249 = vshrl.u32 %v248, 7
      %v250 = vsub.s32 0, %v249
      %v251 = vrot.slane %v246, %v250
      %vm253 = vcmask 130048
      %v255 = vsel %vm253, %v228, 0
      %v258 = vsel %vm253, %v229, 0
      %v261 = vsel %vm253, %v230, 0
      %v264 = vsel %vm253, %v231, 0
      %v267 = vsel %vm253, %v232, 0
      %v270 = vsel %vm253, %v233, 0
      %v273 = vsel %vm253, %v234, 0
      %v276 = vsel %vm253, %v235, 0
      %v279 = vsel %vm253, %v236, 0
      %v282 = vsel %vm253, %v237, 0
      %v285 = vsel %vm253, %v238, 0
      %v288 = vsel %vm253, %v239, 0
      %v291 = vsel %vm253, %v240, 0
      %v294 = vsel %vm253, %v241, 0
      %v297 = vsel %vm253, %v242, 0
      %v300 = vsel %vm253, %v243, 0
      %302 = vmatprep.subr.mxu0 0.0
      %303 = vmatpush1.msra.mxu0 0.0
      %304 = vmatprep.subr.mxu0 0.0
      %305 = vmatpush1.msra.mxu0 0.0
      %306 = vmatprep.subr.mxu0 0.0
      %307 = vmatpush1.msra.mxu0 0.0
      %308 = vmatprep.subr.mxu0 0.0
      %309 = vmatpush1.msra.mxu0 0.0
      %310 = vmatprep.subr.mxu0 0.0
      %311 = vmatpush1.msra.mxu0 0.0
      %312 = vmatprep.subr.mxu0 0.0
      %313 = vmatpush1.msra.mxu0 0.0
      %314 = vmatprep.subr.mxu0 0.0
      %315 = vmatpush1.msra.mxu0 0.0
      %316 = vmatprep.subr.mxu0 0.0
      %317 = vmatpush1.msra.mxu0 0.0
      %318 = vmatprep.subr.mxu0 0.0
      %319 = vmatpush1.msra.mxu0 0.0
      %320 = vmatprep.subr.mxu0 0.0
      %321 = vmatpush1.msra.mxu0 0.0
      %322 = vmatprep.subr.mxu0 0.0
      %323 = vmatpush1.msra.mxu0 0.0
      %324 = vmatprep.subr.mxu0 0.0
      %325 = vmatpush1.msra.mxu0 0.0
      %326 = vmatprep.subr.mxu0 0.0
      %327 = vmatpush1.msra.mxu0 0.0
      %328 = vmatprep.subr.mxu0 0.0
      %329 = vmatpush1.msra.mxu0 0.0
      %330 = vmatprep.subr.mxu0 0.0
      %331 = vmatpush1.msra.mxu0 %v245
      %332 = vmatprep.subr.mxu0 0.0
      %333 = vmatpush1.msra.mxu0 %v244
      %334 = vmatprep.subr.mxu0 0.0
      %335 = vmatpush2.msra.mxu0 0.0
      %336 = vmatprep.subr.mxu0 0.0
      %337 = vmatpush2.msra.mxu0 0.0
      %338 = vmatprep.subr.mxu0 0.0
      %339 = vmatpush2.msra.mxu0 0.0
      %340 = vmatprep.subr.mxu0 0.0
      %341 = vmatpush2.msra.mxu0 0.0
      %342 = vmatprep.subr.mxu0 0.0
      %343 = vmatpush2.msra.mxu0 0.0
      %344 = vmatprep.subr.mxu0 0.0
      %345 = vmatpush2.msra.mxu0 0.0
      %346 = vmatprep.subr.mxu0 0.0
      %347 = vmatpush2.msra.mxu0 0.0
      %348 = vmatprep.subr.mxu0 0.0
      %349 = vmatpush2.msra.mxu0 0.0
      %350 = vmatprep.subr.mxu0 0.0
      %351 = vmatpush2.msra.mxu0 0.0
      %352 = vmatprep.subr.mxu0 0.0
      %353 = vmatpush2.msra.mxu0 0.0
      %354 = vmatprep.subr.mxu0 0.0
      %355 = vmatpush2.msra.mxu0 0.0
      %356 = vmatprep.subr.mxu0 0.0
      %357 = vmatpush2.msra.mxu0 0.0
      %358 = vmatprep.subr.mxu0 0.0
      %359 = vmatpush2.msra.mxu0 0.0
      %360 = vmatprep.subr.mxu0 0.0
      %361 = vmatpush2.msra.mxu0 0.0
      %362 = vmatprep.subr.mxu0 0.0
      %363 = vmatpush2.msra.mxu0 0.0
      %364 = vmatprep.subr.mxu0 0.0
      %365 = vmatpush2.msra.mxu0 0.0
      %366 = vmatprep.mubr.f32.mxu0 0.0
      %367 = vmatmul.mubr.f32.gmra.mxu0 %v255
      %v368 = vpop.f32.mrf.mxu0
      %v369 = vadd.f32 %v251, %v368
      %v370 = vpop.f32.mrf.mxu0
      %371 = vmatprep.mubr.f32.mxu0 0.0
      %372 = vmatmul.mubr.f32.gmra.mxu0 %v258
      %v373 = vpop.f32.mrf.mxu0
      %v374 = vadd.f32 %v251, %v373
      %v375 = vpop.f32.mrf.mxu0
      %376 = vmatprep.mubr.f32.mxu0 0.0
      %377 = vmatmul.mubr.f32.gmra.mxu0 %v261
      %v378 = vpop.f32.mrf.mxu0
      %v379 = vadd.f32 %v251, %v378
      %v380 = vpop.f32.mrf.mxu0
      %381 = vmatprep.mubr.f32.mxu0 0.0
      %382 = vmatmul.mubr.f32.gmra.mxu0 %v264
      %v383 = vpop.f32.mrf.mxu0
      %v384 = vadd.f32 %v251, %v383
      %v385 = vpop.f32.mrf.mxu0
      %386 = vmatprep.mubr.f32.mxu0 0.0
      %387 = vmatmul.mubr.f32.gmra.mxu0 %v267
      %v388 = vpop.f32.mrf.mxu0
      %v389 = vadd.f32 %v251, %v388
      %v390 = vpop.f32.mrf.mxu0
      %391 = vmatprep.mubr.f32.mxu0 0.0
      %392 = vmatmul.mubr.f32.gmra.mxu0 %v270
      %v393 = vpop.f32.mrf.mxu0
      %v394 = vadd.f32 %v251, %v393
      %v395 = vpop.f32.mrf.mxu0
      %396 = vmatprep.mubr.f32.mxu0 0.0
      %397 = vmatmul.mubr.f32.gmra.mxu0 %v273
      %v398 = vpop.f32.mrf.mxu0
      %v399 = vadd.f32 %v251, %v398
      %v400 = vpop.f32.mrf.mxu0
      %401 = vmatprep.mubr.f32.mxu0 0.0
      %402 = vmatmul.mubr.f32.gmra.mxu0 %v276
      %v403 = vpop.f32.mrf.mxu0
      %v404 = vadd.f32 %v251, %v403
      %v405 = vpop.f32.mrf.mxu0
      %406 = vmatprep.mubr.f32.mxu0 0.0
      %407 = vmatmul.mubr.f32.gmra.mxu0 %v279
      %v408 = vpop.f32.mrf.mxu0
      %v409 = vadd.f32 %v251, %v408
      %v410 = vpop.f32.mrf.mxu0
      %411 = vmatprep.mubr.f32.mxu0 0.0
      %412 = vmatmul.mubr.f32.gmra.mxu0 %v282
      %v413 = vpop.f32.mrf.mxu0
      %v414 = vadd.f32 %v251, %v413
      %v415 = vpop.f32.mrf.mxu0
      %416 = vmatprep.mubr.f32.mxu0 0.0
      %417 = vmatmul.mubr.f32.gmra.mxu0 %v285
      %v418 = vpop.f32.mrf.mxu0
      %v419 = vadd.f32 %v251, %v418
      %v420 = vpop.f32.mrf.mxu0
      %421 = vmatprep.mubr.f32.mxu0 0.0
      %422 = vmatmul.mubr.f32.gmra.mxu0 %v288
      %v423 = vpop.f32.mrf.mxu0
      %v424 = vadd.f32 %v251, %v423
      %v425 = vpop.f32.mrf.mxu0
      %426 = vmatprep.mubr.f32.mxu0 0.0
      %427 = vmatmul.mubr.f32.gmra.mxu0 %v291
      %v428 = vpop.f32.mrf.mxu0
      %v429 = vadd.f32 %v251, %v428
      %v430 = vpop.f32.mrf.mxu0
      %431 = vmatprep.mubr.f32.mxu0 0.0
      %432 = vmatmul.mubr.f32.gmra.mxu0 %v294
      %v433 = vpop.f32.mrf.mxu0
      %v434 = vadd.f32 %v251, %v433
      %v435 = vpop.f32.mrf.mxu0
      %436 = vmatprep.mubr.f32.mxu0 0.0
      %437 = vmatmul.mubr.f32.gmra.mxu0 %v297
      %v438 = vpop.f32.mrf.mxu0
      %v439 = vadd.f32 %v251, %v438
      %v440 = vpop.f32.mrf.mxu0
      %441 = vmatprep.mubr.f32.mxu0 0.0
      %442 = vmatmul.mubr.f32.gmra.mxu0 %v300
      %v443 = vpop.f32.mrf.mxu0
      %v444 = vadd.f32 %v251, %v443
      %v445 = vpop.f32.mrf.mxu0
      %446 = vdwg.mxu0
      %v447 = vmax.f32 %v369, 0.0
      %v448 = vmax.f32 %v374, 0.0
      %v449 = vmax.f32 %v379, 0.0
      %v450 = vmax.f32 %v384, 0.0
      %v451 = vmax.f32 %v389, 0.0
      %v452 = vmax.f32 %v394, 0.0
      %v453 = vmax.f32 %v399, 0.0
      %v454 = vmax.f32 %v404, 0.0
      %v455 = vmax.f32 %v409, 0.0
      %v456 = vmax.f32 %v414, 0.0
      %v457 = vmax.f32 %v419, 0.0
      %v458 = vmax.f32 %v424, 0.0
      %v459 = vmax.f32 %v429, 0.0
      %v460 = vmax.f32 %v434, 0.0
      %v461 = vmax.f32 %v439, 0.0
      %v462 = vmax.f32 %v444, 0.0
      %v463 = vld [vmem:[%s3] sm:$0xff]
      %v464 = vld [vmem:[%s3 + $0x8] sm:$0xff]
      %v465 = vld [vmem:[%s3 + $0x10] sm:$0xff]
      %v466 = vld [vmem:[%s3 + $0x18] sm:$0xff]
      %v467 = vld [vmem:[%s3 + $0x20] sm:$0xff]
      %v468 = vld [vmem:[%s3 + $0x28] sm:$0xff]
      %v469 = vld [vmem:[%s3 + $0x30] sm:$0xff]
      %v470 = vld [vmem:[%s3 + $0x38] sm:$0xff]
      %v471 = vld [vmem:[%s4] sm:$0x1]
      %v473 = vlaneseq
      %v474 = vshrl.u32 %v473, 7
      %v475 = vsub.s32 0, %v474
      %v476 = vrot.slane %v471, %v475
      %vm478 = vcmask 523264
      %v480 = vsel %vm478, %v447, 0
      %v483 = vsel %vm478, %v448, 0
      %v486 = vsel %vm478, %v449, 0
      %v489 = vsel %vm478, %v450, 0
      %v492 = vsel %vm478, %v451, 0
      %v495 = vsel %vm478, %v452, 0
      %v498 = vsel %vm478, %v453, 0
      %v501 = vsel %vm478, %v454, 0
      %v504 = vsel %vm478, %v455, 0
      %v507 = vsel %vm478, %v456, 0
      %v510 = vsel %vm478, %v457, 0
      %v513 = vsel %vm478, %v458, 0
      %v516 = vsel %vm478, %v459, 0
      %v519 = vsel %vm478, %v460, 0
      %v522 = vsel %vm478, %v461, 0
      %v525 = vsel %vm478, %v462, 0
      %527 = vmatprep.subr.mxu0 0.0
      %528 = vmatpush1.msra.mxu0 0.0
      %529 = vmatprep.subr.mxu0 0.0
      %530 = vmatpush1.msra.mxu0 0.0
      %531 = vmatprep.subr.mxu0 0.0
      %532 = vmatpush1.msra.mxu0 0.0
      %533 = vmatprep.subr.mxu0 0.0
      %534 = vmatpush1.msra.mxu0 0.0
      %535 = vmatprep.subr.mxu0 0.0
      %536 = vmatpush1.msra.mxu0 0.0
      %537 = vmatprep.subr.mxu0 0.0
      %538 = vmatpush1.msra.mxu0 0.0
      %539 = vmatprep.subr.mxu0 0.0
      %540 = vmatpush1.msra.mxu0 0.0
      %541 = vmatprep.subr.mxu0 0.0
      %542 = vmatpush1.msra.mxu0 0.0
      %543 = vmatprep.subr.mxu0 0.0
      %544 = vmatpush1.msra.mxu0 %v470
      %545 = vmatprep.subr.mxu0 0.0
      %546 = vmatpush1.msra.mxu0 %v469
      %547 = vmatprep.subr.mxu0 0.0
      %548 = vmatpush1.msra.mxu0 %v468
      %549 = vmatprep.subr.mxu0 0.0
      %550 = vmatpush1.msra.mxu0 %v467
      %551 = vmatprep.subr.mxu0 0.0
      %552 = vmatpush1.msra.mxu0 %v466
      %553 = vmatprep.subr.mxu0 0.0
      %554 = vmatpush1.msra.mxu0 %v465
      %555 = vmatprep.subr.mxu0 0.0
      %556 = vmatpush1.msra.mxu0 %v464
      %557 = vmatprep.subr.mxu0 0.0
      %558 = vmatpush1.msra.mxu0 %v463
      %559 = vmatprep.subr.mxu0 0.0
      %560 = vmatpush2.msra.mxu0 0.0
      %561 = vmatprep.subr.mxu0 0.0
      %562 = vmatpush2.msra.mxu0 0.0
      %563 = vmatprep.subr.mxu0 0.0
      %564 = vmatpush2.msra.mxu0 0.0
      %565 = vmatprep.subr.mxu0 0.0
      %566 = vmatpush2.msra.mxu0 0.0
      %567 = vmatprep.subr.mxu0 0.0
      %568 = vmatpush2.msra.mxu0 0.0
      %569 = vmatprep.subr.mxu0 0.0
      %570 = vmatpush2.msra.mxu0 0.0
      %571 = vmatprep.subr.mxu0 0.0
      %572 = vmatpush2.msra.mxu0 0.0
      %573 = vmatprep.subr.mxu0 0.0
      %574 = vmatpush2.msra.mxu0 0.0
      %575 = vmatprep.subr.mxu0 0.0
      %576 = vmatpush2.msra.mxu0 0.0
      %577 = vmatprep.subr.mxu0 0.0
      %578 = vmatpush2.msra.mxu0 0.0
      %579 = vmatprep.subr.mxu0 0.0
      %580 = vmatpush2.msra.mxu0 0.0
      %581 = vmatprep.subr.mxu0 0.0
      %582 = vmatpush2.msra.mxu0 0.0
      %583 = vmatprep.subr.mxu0 0.0
      %584 = vmatpush2.msra.mxu0 0.0
      %585 = vmatprep.subr.mxu0 0.0
      %586 = vmatpush2.msra.mxu0 0.0
      %587 = vmatprep.subr.mxu0 0.0
      %588 = vmatpush2.msra.mxu0 0.0
      %589 = vmatprep.subr.mxu0 0.0
      %590 = vmatpush2.msra.mxu0 0.0
      %591 = vmatprep.mubr.f32.mxu0 0.0
      %592 = vmatmul.mubr.f32.gmra.mxu0 %v480
      %v593 = vpop.f32.mrf.mxu0
      %v594 = vadd.f32 %v476, %v593
      %v595 = vpop.f32.mrf.mxu0
      %596 = vmatprep.mubr.f32.mxu0 0.0
      %597 = vmatmul.mubr.f32.gmra.mxu0 %v483
      %v598 = vpop.f32.mrf.mxu0
      %v599 = vadd.f32 %v476, %v598
      %v600 = vpop.f32.mrf.mxu0
      %601 = vmatprep.mubr.f32.mxu0 0.0
      %602 = vmatmul.mubr.f32.gmra.mxu0 %v486
      %v603 = vpop.f32.mrf.mxu0
      %v604 = vadd.f32 %v476, %v603
      %v605 = vpop.f32.mrf.mxu0
      %606 = vmatprep.mubr.f32.mxu0 0.0
      %607 = vmatmul.mubr.f32.gmra.mxu0 %v489
      %v608 = vpop.f32.mrf.mxu0
      %v609 = vadd.f32 %v476, %v608
      %v610 = vpop.f32.mrf.mxu0
      %611 = vmatprep.mubr.f32.mxu0 0.0
      %612 = vmatmul.mubr.f32.gmra.mxu0 %v492
      %v613 = vpop.f32.mrf.mxu0
      %v614 = vadd.f32 %v476, %v613
      %v615 = vpop.f32.mrf.mxu0
      %616 = vmatprep.mubr.f32.mxu0 0.0
      %617 = vmatmul.mubr.f32.gmra.mxu0 %v495
      %v618 = vpop.f32.mrf.mxu0
      %v619 = vadd.f32 %v476, %v618
      %v620 = vpop.f32.mrf.mxu0
      %621 = vmatprep.mubr.f32.mxu0 0.0
      %622 = vmatmul.mubr.f32.gmra.mxu0 %v498
      %v623 = vpop.f32.mrf.mxu0
      %v624 = vadd.f32 %v476, %v623
      %v625 = vpop.f32.mrf.mxu0
      %626 = vmatprep.mubr.f32.mxu0 0.0
      %627 = vmatmul.mubr.f32.gmra.mxu0 %v501
      %v628 = vpop.f32.mrf.mxu0
      %v629 = vadd.f32 %v476, %v628
      %v630 = vpop.f32.mrf.mxu0
      %631 = vmatprep.mubr.f32.mxu0 0.0
      %632 = vmatmul.mubr.f32.gmra.mxu0 %v504
      %v633 = vpop.f32.mrf.mxu0
      %v634 = vadd.f32 %v476, %v633
      %v635 = vpop.f32.mrf.mxu0
      %636 = vmatprep.mubr.f32.mxu0 0.0
      %637 = vmatmul.mubr.f32.gmra.mxu0 %v507
      %v638 = vpop.f32.mrf.mxu0
      %v639 = vadd.f32 %v476, %v638
      %v640 = vpop.f32.mrf.mxu0
      %641 = vmatprep.mubr.f32.mxu0 0.0
      %642 = vmatmul.mubr.f32.gmra.mxu0 %v510
      %v643 = vpop.f32.mrf.mxu0
      %v644 = vadd.f32 %v476, %v643
      %v645 = vpop.f32.mrf.mxu0
      %646 = vmatprep.mubr.f32.mxu0 0.0
      %647 = vmatmul.mubr.f32.gmra.mxu0 %v513
      %v648 = vpop.f32.mrf.mxu0
      %v649 = vadd.f32 %v476, %v648
      %v650 = vpop.f32.mrf.mxu0
      %651 = vmatprep.mubr.f32.mxu0 0.0
      %652 = vmatmul.mubr.f32.gmra.mxu0 %v516
      %v653 = vpop.f32.mrf.mxu0
      %v654 = vadd.f32 %v476, %v653
      %v655 = vpop.f32.mrf.mxu0
      %656 = vmatprep.mubr.f32.mxu0 0.0
      %657 = vmatmul.mubr.f32.gmra.mxu0 %v519
      %v658 = vpop.f32.mrf.mxu0
      %v659 = vadd.f32 %v476, %v658
      %v660 = vpop.f32.mrf.mxu0
      %661 = vmatprep.mubr.f32.mxu0 0.0
      %662 = vmatmul.mubr.f32.gmra.mxu0 %v522
      %v663 = vpop.f32.mrf.mxu0
      %v664 = vadd.f32 %v476, %v663
      %v665 = vpop.f32.mrf.mxu0
      %666 = vmatprep.mubr.f32.mxu0 0.0
      %667 = vmatmul.mubr.f32.gmra.mxu0 %v525
      %v668 = vpop.f32.mrf.mxu0
      %v669 = vadd.f32 %v476, %v668
      %v670 = vpop.f32.mrf.mxu0
      %671 = vdwg.mxu0
      %672 = vst [vmem:[%s226] sm:$0xff] %v594
      %673 = vst [vmem:[%s226 + $0x8] sm:$0xff] %v599
      %674 = vst [vmem:[%s226 + $0x10] sm:$0xff] %v604
      %675 = vst [vmem:[%s226 + $0x18] sm:$0xff] %v609
      %676 = vst [vmem:[%s226 + $0x20] sm:$0xff] %v614
      %677 = vst [vmem:[%s226 + $0x28] sm:$0xff] %v619
      %678 = vst [vmem:[%s226 + $0x30] sm:$0xff] %v624
      %679 = vst [vmem:[%s226 + $0x38] sm:$0xff] %v629
      %680 = vst [vmem:[%s226 + $0x40] sm:$0xff] %v634
      %681 = vst [vmem:[%s226 + $0x48] sm:$0xff] %v639
      %682 = vst [vmem:[%s226 + $0x50] sm:$0xff] %v644
      %683 = vst [vmem:[%s226 + $0x58] sm:$0xff] %v649
      %684 = vst [vmem:[%s226 + $0x60] sm:$0xff] %v654
      %685 = vst [vmem:[%s226 + $0x68] sm:$0xff] %v659
      %686 = vst [vmem:[%s226 + $0x70] sm:$0xff] %v664
      %687 = vst [vmem:[%s226 + $0x78] sm:$0xff] %v669
      %s688 = smul.u32 16, %s16
      %p689 = scmp.lt.s32.totalorder %s688, 31
      %s690 = scalar_select %p689, %s688, 31
      %s691 = smul.addr %s690, 8
      %s692 = scalar_lea.vmem %s5, %s691
      // Predicated region
      $region41: #{simple_mlp_forward.1} parent=39 // pred_check
        %p693 = pneg %p144
      $region42: #{simple_mlp_forward.1} parent=39 // pred_check_branch
        %695 = sbr.rel (%p693) target = $region44
      $region43: #{simple_mlp_forward.1} parent=39 // pred_region
        %s696 = smul.u32 16, %s16
      $region44: #{simple_mlp_forward.1} parent=39 // pred_fallthru
        _
    $region40: #{simple_mlp_forward.1} parent=5 // pred_fallthru
      _
    %p697 = scmp.le.s32.totalorder 2, %s11
    // Predicated region
    $region45: #{simple_mlp_forward.1} parent=5 // pred_check
      %p698 = pneg %p697
    $region46: #{simple_mlp_forward.1} parent=5 // pred_check_branch
      %700 = sbr.rel (%p698) target = $region48
    $region47: #{simple_mlp_forward.1} parent=5 // pred_region
      %s701 = ssub.s32 %s11, 2
      // Predicated region
      $region49: #{simple_mlp_forward.1} parent=47 // pred_check
        %p702 = pneg %p150
      $region50: #{simple_mlp_forward.1} parent=47 // pred_check_branch
        %704 = sbr.rel (%p702) target = $region52
      $region51: #{simple_mlp_forward.1} parent=47 // pred_region
        %s705 = smul.u32 16, %s17
        %p706 = scmp.lt.s32.totalorder %s705, 31
        %s707 = scalar_select %p706, %s705, 31
        %s708 = smul.addr %s707, 8
        %s709 = scalar_lea.vmem %s5, %s708
      $region52: #{simple_mlp_forward.1} parent=47 // pred_fallthru
        _
    $region48: #{simple_mlp_forward.1} parent=5 // pred_fallthru
      _
  $region6: #{simple_mlp_forward.1} parent=0 // loop_footer
    %s15 = sadd.s32 1, %s11
  $region7: #{simple_mlp_forward.1} parent=0 // loop_footer_branch
    %10 = sbr.rel target = $region3
  $region8: #{simple_mlp_forward.1} parent=0 // loop_exit
    _

</llo_original>
